<compile_context>
chip_gen: v7x
topology: tpu7x:2x2x1
jax: 0.10.0
libtpu: 0.0.40
codegen_flags: <defaults>
</compile_context>

<pallas_src>
import jax
import jax.numpy as jnp
from jax.experimental import pallas as pl
from jax.experimental.pallas import tpu as pltpu


def ddpg_critic_kernel(s_ref, a_ref,
                       w1_ref, b1_ref,
                       w2s_ref, w2a_ref, b2_ref,
                       w3_ref, b3_ref,
                       w4_ref, b4_ref,
                       out_ref):
    f32 = jnp.float32
    w1 = w1_ref[...]
    cdt = w1.dtype  # MXU input dtype (float32 or bfloat16); accumulate in f32

    # fc1 + relu  (MXU)
    xs = jnp.dot(s_ref[...].astype(cdt), w1, preferred_element_type=f32)
    xs = jnp.maximum(xs + b1_ref[...], 0.0)

    # fc2 on concat(xs, action): split matmul. State half on the MXU; the tiny
    # action half (K = action_size) as statically-unrolled VPU broadcast-MACs,
    # which removes a mostly-padding K=4 MXU round trip from the critical path.
    x = jnp.dot(xs.astype(cdt), w2s_ref[...], preferred_element_type=f32)
    x = x + b2_ref[...]
    a = a_ref[...]                                  # (TB, A) float32
    w2a = w2a_ref[...].astype(f32)                  # (A, H2)
    act_dim = a.shape[1]
    if act_dim <= 8:                                # static shape decision
        for j in range(act_dim):
            x = x + a[:, j:j + 1] * w2a[j:j + 1, :]
    else:
        x = x + jnp.dot(a.astype(cdt), w2a_ref[...], preferred_element_type=f32)
    x = jnp.maximum(x, 0.0)

    # fc3 + relu  (MXU)
    x = jnp.dot(x.astype(cdt), w3_ref[...], preferred_element_type=f32)
    x = jnp.maximum(x + b3_ref[...], 0.0)

    # fc4 (out_features = 1): VPU multiply + XLU lane-reduce, not an N=1 matmul.
    w4 = w4_ref[...].astype(f32)                    # (1, H3) row
    q = jnp.sum(x * w4, axis=-1, keepdims=True) + b4_ref[0, 0]
    out_ref[...] = q.astype(out_ref.dtype)


def _round_up(x, m):
    return ((x + m - 1) // m) * m


def ddpg_critic_forward(state, action, params, *, tile_batch=512):
    """state: (B, state_size) f32, action: (B, action_size) f32 -> (B, 1) f32."""
    B = state.shape[0]
    w1 = params["w1"]
    s_pad_dim, h1 = w1.shape            # state dim already padded to multiple of 8
    h2, h3 = params["w3"].shape
    a_dim = params["w2a"].shape[0]

    # Zero-pad the state feature dim to match padded w1 rows (exact: pads are 0).
    if state.shape[1] != s_pad_dim:
        state = jnp.pad(state, ((0, 0), (0, s_pad_dim - state.shape[1])))

    # Batch tile: sublane-aligned (multiple of 8), capped by tile_batch so a
    # large batch is pipelined in TB-sized chunks with weights held resident.
    tb = min(tile_batch, _round_up(B, 8))
    b_pad = _round_up(B, tb)
    if b_pad != B:
        state = jnp.pad(state, ((0, b_pad - B), (0, 0)))
        action = jnp.pad(action, ((0, b_pad - B), (0, 0)))

    grid = (b_pad // tb,)

    def batch_spec(cols):
        return pl.BlockSpec((tb, cols), lambda i: (i, 0))

    def resident(shape):                # weight tile never changes -> stays in VMEM
        return pl.BlockSpec(shape, lambda i: (0, 0))

    out = pl.pallas_call(
        ddpg_critic_kernel,
        out_shape=jax.ShapeDtypeStruct((b_pad, 1), jnp.float32),
        grid=grid,
        in_specs=[
            batch_spec(s_pad_dim),                              # state
            batch_spec(a_dim),                                  # action
            resident((s_pad_dim, h1)),                          # w1
            resident((1, h1)),                                  # b1
            resident((h1, h2)),                                 # w2 (state rows)
            resident((a_dim, h2)),                              # w2 (action rows)
            resident((1, h2)),                                  # b2
            resident((h2, h3)),                                 # w3
            resident((1, h3)),                                  # b3
            resident((1, h3)),                                  # w4 row
            pl.BlockSpec(memory_space=pltpu.MemorySpace.SMEM),  # b4 scalar
        ],
        out_specs=pl.BlockSpec((tb, 1), lambda i: (i, 0)),
        compiler_params=pltpu.CompilerParams(
            dimension_semantics=("parallel",),   # shard batch tiles across TCs (v7x)
        ),
    )(state, action,
      params["w1"], params["b1"],
      params["w2s"], params["w2a"], params["b2"],
      params["w3"], params["b3"],
      params["w4"], params["b4"])
    return out[:B]


def init_params(key, state_size, action_size, hidden_units=(256, 128, 64),
                weight_dtype=jnp.float32):
    """Deterministic init mirroring the PyTorch module's reset_parameters().

    Weights stored as (in_features, out_features), except fc4 kept as (1, h3).
    hidden_init in the torch code uses weight.size()[0] == out_features as
    'fan_in', so the limit is 1/sqrt(out_features) for fc1..fc3 and +-0.003 for
    fc4.  Biases use PyTorch's default Linear init: U(-1/sqrt(in), 1/sqrt(in)).
    w1 rows are zero-padded so the fc1 K dimension is sublane-aligned (mult. of 8).
    Biases stay float32; large weight matrices may be cast to bf16 (v6e/v7x).
    """
    h1, h2, h3 = hidden_units
    ks = jax.random.split(key, 8)

    def u(k, shape, lim):
        return jax.random.uniform(k, shape, jnp.float32, -lim, lim)

    lim1 = 1.0 / (h1 ** 0.5)
    lim2 = 1.0 / (h2 ** 0.5)
    lim3 = 1.0 / (h3 ** 0.5)

    w1 = u(ks[0], (state_size, h1), lim1)
    b1 = u(ks[1], (1, h1), 1.0 / (state_size ** 0.5))
    w2 = u(ks[2], (h1 + action_size, h2), lim2)
    b2 = u(ks[3], (1, h2), 1.0 / ((h1 + action_size) ** 0.5))
    w3 = u(ks[4], (h2, h3), lim3)
    b3 = u(ks[5], (1, h3), 1.0 / (h2 ** 0.5))
    w4 = u(ks[6], (1, h3), 0.003)              # PyTorch fc4.weight layout (out, in)
    b4 = u(ks[7], (1, 1), 1.0 / (h3 ** 0.5))

    s_pad = _round_up(state_size, 8)
    if s_pad != state_size:
        w1 = jnp.pad(w1, ((0, s_pad - state_size), (0, 0)))   # zero rows: exact

    wd = weight_dtype
    return {
        "w1": w1.astype(wd), "b1": b1,
        "w2s": w2[:h1].astype(wd), "w2a": w2[h1:].astype(wd), "b2": b2,
        "w3": w3.astype(wd), "b3": b3,
        "w4": w4.astype(wd), "b4": b4,
    }


def reference_forward(state, action, params):
    """Pure-JAX mirror of the kernel math.  With float32 params this is exactly
    the PyTorch DDPGCritic forward (the concat is expanded into a split matmul,
    which is algebraically identical; zero-padding contributes zero)."""
    f32 = jnp.float32
    cdt = params["w1"].dtype
    s_pad_dim = params["w1"].shape[0]
    pad = s_pad_dim - state.shape[1]
    if pad:
        state = jnp.pad(state, ((0, 0), (0, pad)))
    xs = jnp.dot(state.astype(cdt), params["w1"], preferred_element_type=f32)
    xs = jnp.maximum(xs + params["b1"], 0.0)
    x = jnp.dot(xs.astype(cdt), params["w2s"], preferred_element_type=f32)
    x = x + params["b2"] + jnp.dot(action, params["w2a"].astype(f32))
    x = jnp.maximum(x, 0.0)
    x = jnp.dot(x.astype(cdt), params["w3"], preferred_element_type=f32)
    x = jnp.maximum(x + params["b3"], 0.0)
    return jnp.sum(x * params["w4"].astype(f32), axis=-1, keepdims=True) + params["b4"]


if __name__ == "__main__":
    state_size, action_size = 33, 4
    batch = 8
    key = jax.random.PRNGKey(0)
    k_param, k_state, k_action = jax.random.split(key, 3)

    state = jax.random.normal(k_state, (batch, state_size), jnp.float32)
    action = jax.random.uniform(k_action, (batch, action_size), jnp.float32,
                                -1.0, 1.0)

    # float32 path: matches the original module's forward exactly.
    params_f32 = init_params(k_param, state_size, action_size)
    q = jax.block_until_ready(ddpg_critic_forward(state, action, params_f32))
    q_ref = reference_forward(state, action, params_f32)
    assert q.shape == (batch, 1)
    assert jnp.allclose(q, q_ref, atol=1e-4, rtol=1e-4), (q, q_ref)

    # bf16-weight option (v6e/v7x MXU throughput): f32 accumulation in-kernel.
    params_bf16 = init_params(k_param, state_size, action_size,
                              weight_dtype=jnp.bfloat16)
    q16 = jax.block_until_ready(ddpg_critic_forward(state, action, params_bf16))
    q16_ref = reference_forward(state, action, params_bf16)
    assert jnp.allclose(q16, q16_ref, atol=1e-2, rtol=1e-2), (q16, q16_ref)

    # Larger batch exercises the multi-step grid (pipelined tiles, resident
    # weights, batch padding, megacore-parallel semantics).
    kb_s, kb_a = jax.random.split(jax.random.PRNGKey(1), 2)
    big_b = 1000
    big_state = jax.random.normal(kb_s, (big_b, state_size), jnp.float32)
    big_action = jax.random.uniform(kb_a, (big_b, action_size), jnp.float32,
                                    -1.0, 1.0)
    qb = jax.block_until_ready(
        ddpg_critic_forward(big_state, big_action, params_f32))
    qb_ref = reference_forward(big_state, big_action, params_f32)
    assert qb.shape == (big_b, 1)
    assert jnp.allclose(qb, qb_ref, atol=1e-4, rtol=1e-4)

    print("KERNEL_OK")
</pallas_src>

<mosaic_0001>
module attributes {stable_mosaic.version = 11 : i64} {
  func.func @ddpg_critic_kernel(%arg0: i32, %arg1: memref<8x40xf32, #tpu.memory_space<vmem>>, %arg2: memref<8x4xf32, #tpu.memory_space<vmem>>, %arg3: memref<40x256xf32, #tpu.memory_space<vmem>>, %arg4: memref<1x256xf32, #tpu.memory_space<vmem>>, %arg5: memref<256x128xf32, #tpu.memory_space<vmem>>, %arg6: memref<4x128xf32, #tpu.memory_space<vmem>>, %arg7: memref<1x128xf32, #tpu.memory_space<vmem>>, %arg8: memref<128x64xf32, #tpu.memory_space<vmem>>, %arg9: memref<1x64xf32, #tpu.memory_space<vmem>>, %arg10: memref<1x64xf32, #tpu.memory_space<vmem>>, %arg11: memref<1x1xf32, #tpu.memory_space<smem>>, %arg12: memref<8x1xf32, #tpu.memory_space<vmem>>) attributes {dimension_semantics = [#tpu.dimension_semantics<parallel>], iteration_bounds = array<i64: 1>, scalar_prefetch = 0 : i64, scratch_operands = 0 : i64, tpu.core_type = #tpu.core_type<tc>, window_params = [{transform_indices = @transform_0, window_bounds = array<i64: 8, 40>}, {transform_indices = @transform_1, window_bounds = array<i64: 8, 4>}, {pipeline_mode = #tpu.pipeline_mode<synchronous>, transform_indices = @transform_2, window_bounds = array<i64: 40, 256>}, {pipeline_mode = #tpu.pipeline_mode<synchronous>, transform_indices = @transform_3, window_bounds = array<i64: 1, 256>}, {pipeline_mode = #tpu.pipeline_mode<synchronous>, transform_indices = @transform_4, window_bounds = array<i64: 256, 128>}, {pipeline_mode = #tpu.pipeline_mode<synchronous>, transform_indices = @transform_5, window_bounds = array<i64: 4, 128>}, {pipeline_mode = #tpu.pipeline_mode<synchronous>, transform_indices = @transform_6, window_bounds = array<i64: 1, 128>}, {pipeline_mode = #tpu.pipeline_mode<synchronous>, transform_indices = @transform_7, window_bounds = array<i64: 128, 64>}, {pipeline_mode = #tpu.pipeline_mode<synchronous>, transform_indices = @transform_8, window_bounds = array<i64: 1, 64>}, {pipeline_mode = #tpu.pipeline_mode<synchronous>, transform_indices = @transform_9, window_bounds = array<i64: 1, 64>}, {transform_indices = @transform_10, window_bounds = array<i64: 1, 1>}, {transform_indices = @transform_11, window_bounds = array<i64: 8, 1>}]} {
    %c0 = arith.constant 0 : index
    %c0_0 = arith.constant 0 : index
    %0 = vector.load %arg3[%c0, %c0_0] : memref<40x256xf32, #tpu.memory_space<vmem>>, vector<40x256xf32>
    %c0_1 = arith.constant 0 : index
    %c0_2 = arith.constant 0 : index
    %1 = vector.load %arg1[%c0_1, %c0_2] : memref<8x40xf32, #tpu.memory_space<vmem>>, vector<8x40xf32>
    %cst = arith.constant dense<0.000000e+00> : vector<8x256xf32>
    %2 = tpu.matmul %1, %0, %cst {dimension_numbers = #tpu.dot_dimension_numbers<[1], [0], [0], [1], [0, 0, 1, 1], [], []>} : vector<8x40xf32>, vector<40x256xf32>, vector<8x256xf32> -> vector<8x256xf32>
    %c0_3 = arith.constant 0 : index
    %c0_4 = arith.constant 0 : index
    %3 = vector.load %arg4[%c0_3, %c0_4] : memref<1x256xf32, #tpu.memory_space<vmem>>, vector<1x256xf32>
    %4 = vector.broadcast %3 : vector<1x256xf32> to vector<8x256xf32>
    %5 = arith.addf %2, %4 : vector<8x256xf32>
    %cst_5 = arith.constant 0.000000e+00 : f32
    %6 = vector.broadcast %cst_5 : f32 to vector<8x256xf32>
    %7 = arith.maximumf %5, %6 : vector<8x256xf32>
    %c0_6 = arith.constant 0 : index
    %c0_7 = arith.constant 0 : index
    %8 = vector.load %arg5[%c0_6, %c0_7] : memref<256x128xf32, #tpu.memory_space<vmem>>, vector<256x128xf32>
    %cst_8 = arith.constant dense<0.000000e+00> : vector<8x128xf32>
    %9 = tpu.matmul %7, %8, %cst_8 {dimension_numbers = #tpu.dot_dimension_numbers<[1], [0], [0], [1], [0, 0, 1, 1], [], []>} : vector<8x256xf32>, vector<256x128xf32>, vector<8x128xf32> -> vector<8x128xf32>
    %c0_9 = arith.constant 0 : index
    %c0_10 = arith.constant 0 : index
    %10 = vector.load %arg7[%c0_9, %c0_10] : memref<1x128xf32, #tpu.memory_space<vmem>>, vector<1x128xf32>
    %11 = vector.broadcast %10 : vector<1x128xf32> to vector<8x128xf32>
    %12 = arith.addf %9, %11 : vector<8x128xf32>
    %c0_11 = arith.constant 0 : index
    %c0_12 = arith.constant 0 : index
    %13 = vector.load %arg2[%c0_11, %c0_12] : memref<8x4xf32, #tpu.memory_space<vmem>>, vector<8x4xf32>
    %c0_13 = arith.constant 0 : index
    %c0_14 = arith.constant 0 : index
    %14 = vector.load %arg6[%c0_13, %c0_14] : memref<4x128xf32, #tpu.memory_space<vmem>>, vector<4x128xf32>
    %15 = vector.extract_strided_slice %13 {offsets = [0, 0], sizes = [8, 1], strides = [1, 1]} : vector<8x4xf32> to vector<8x1xf32>
    %16 = vector.extract_strided_slice %14 {offsets = [0, 0], sizes = [1, 128], strides = [1, 1]} : vector<4x128xf32> to vector<1x128xf32>
    %17 = vector.broadcast %15 : vector<8x1xf32> to vector<8x128xf32>
    %18 = vector.broadcast %16 : vector<1x128xf32> to vector<8x128xf32>
    %19 = arith.mulf %17, %18 : vector<8x128xf32>
    %20 = arith.addf %12, %19 : vector<8x128xf32>
    %21 = vector.extract_strided_slice %13 {offsets = [0, 1], sizes = [8, 1], strides = [1, 1]} : vector<8x4xf32> to vector<8x1xf32>
    %22 = vector.extract_strided_slice %14 {offsets = [1, 0], sizes = [1, 128], strides = [1, 1]} : vector<4x128xf32> to vector<1x128xf32>
    %23 = vector.broadcast %21 : vector<8x1xf32> to vector<8x128xf32>
    %24 = vector.broadcast %22 : vector<1x128xf32> to vector<8x128xf32>
    %25 = arith.mulf %23, %24 : vector<8x128xf32>
    %26 = arith.addf %20, %25 : vector<8x128xf32>
    %27 = vector.extract_strided_slice %13 {offsets = [0, 2], sizes = [8, 1], strides = [1, 1]} : vector<8x4xf32> to vector<8x1xf32>
    %28 = vector.extract_strided_slice %14 {offsets = [2, 0], sizes = [1, 128], strides = [1, 1]} : vector<4x128xf32> to vector<1x128xf32>
    %29 = vector.broadcast %27 : vector<8x1xf32> to vector<8x128xf32>
    %30 = vector.broadcast %28 : vector<1x128xf32> to vector<8x128xf32>
    %31 = arith.mulf %29, %30 : vector<8x128xf32>
    %32 = arith.addf %26, %31 : vector<8x128xf32>
    %33 = vector.extract_strided_slice %13 {offsets = [0, 3], sizes = [8, 1], strides = [1, 1]} : vector<8x4xf32> to vector<8x1xf32>
    %34 = vector.extract_strided_slice %14 {offsets = [3, 0], sizes = [1, 128], strides = [1, 1]} : vector<4x128xf32> to vector<1x128xf32>
    %35 = vector.broadcast %33 : vector<8x1xf32> to vector<8x128xf32>
    %36 = vector.broadcast %34 : vector<1x128xf32> to vector<8x128xf32>
    %37 = arith.mulf %35, %36 : vector<8x128xf32>
    %38 = arith.addf %32, %37 : vector<8x128xf32>
    %cst_15 = arith.constant 0.000000e+00 : f32
    %39 = vector.broadcast %cst_15 : f32 to vector<8x128xf32>
    %40 = arith.maximumf %38, %39 : vector<8x128xf32>
    %c0_16 = arith.constant 0 : index
    %c0_17 = arith.constant 0 : index
    %41 = vector.load %arg8[%c0_16, %c0_17] : memref<128x64xf32, #tpu.memory_space<vmem>>, vector<128x64xf32>
    %cst_18 = arith.constant dense<0.000000e+00> : vector<8x64xf32>
    %42 = tpu.matmul %40, %41, %cst_18 {dimension_numbers = #tpu.dot_dimension_numbers<[1], [0], [0], [1], [0, 0, 1, 1], [], []>} : vector<8x128xf32>, vector<128x64xf32>, vector<8x64xf32> -> vector<8x64xf32>
    %c0_19 = arith.constant 0 : index
    %c0_20 = arith.constant 0 : index
    %43 = vector.load %arg9[%c0_19, %c0_20] : memref<1x64xf32, #tpu.memory_space<vmem>>, vector<1x64xf32>
    %44 = vector.broadcast %43 : vector<1x64xf32> to vector<8x64xf32>
    %45 = arith.addf %42, %44 : vector<8x64xf32>
    %cst_21 = arith.constant 0.000000e+00 : f32
    %46 = vector.broadcast %cst_21 : f32 to vector<8x64xf32>
    %47 = arith.maximumf %45, %46 : vector<8x64xf32>
    %c0_22 = arith.constant 0 : index
    %c0_23 = arith.constant 0 : index
    %48 = vector.load %arg10[%c0_22, %c0_23] : memref<1x64xf32, #tpu.memory_space<vmem>>, vector<1x64xf32>
    %49 = vector.broadcast %48 : vector<1x64xf32> to vector<8x64xf32>
    %50 = arith.mulf %47, %49 : vector<8x64xf32>
    %cst_24 = arith.constant dense<0.000000e+00> : vector<8xf32>
    %51 = vector.multi_reduction <add>, %50, %cst_24 [1] : vector<8x64xf32> to vector<8xf32>
    %52 = vector.shape_cast %51 : vector<8xf32> to vector<8x1xf32>
    %c0_25 = arith.constant 0 : index
    %c0_26 = arith.constant 0 : index
    %53 = memref.load %arg11[%c0_25, %c0_26] : memref<1x1xf32, #tpu.memory_space<smem>>
    %54 = vector.broadcast %53 : f32 to vector<8x1xf32>
    %55 = arith.addf %52, %54 : vector<8x1xf32>
    %c0_27 = arith.constant 0 : index
    %c0_28 = arith.constant 0 : index
    %56 = vector.load %arg12[%c0_27, %c0_28] : memref<8x1xf32, #tpu.memory_space<vmem>>, vector<8x1xf32>
    tpu.vector_store %arg12[%c0_27, %c0_28], %55 {strides = array<i32>} : memref<8x1xf32, #tpu.memory_space<vmem>>, vector<8x1xf32>,
    return
  }
  func.func @transform_0(%arg0: i32) -> (i32, i32) {
    %c0_i32 = arith.constant 0 : i32
    %c0_i32_0 = arith.constant 0 : i32
    return %arg0, %c0_i32 : i32, i32
  }
  func.func @transform_1(%arg0: i32) -> (i32, i32) {
    %c0_i32 = arith.constant 0 : i32
    %c0_i32_0 = arith.constant 0 : i32
    return %arg0, %c0_i32 : i32, i32
  }
  func.func @transform_2(%arg0: i32) -> (i32, i32) {
    %c0_i32 = arith.constant 0 : i32
    %c0_i32_0 = arith.constant 0 : i32
    %c0_i32_1 = arith.constant 0 : i32
    return %c0_i32, %c0_i32_0 : i32, i32
  }
  func.func @transform_3(%arg0: i32) -> (i32, i32) {
    %c0_i32 = arith.constant 0 : i32
    %c0_i32_0 = arith.constant 0 : i32
    %c0_i32_1 = arith.constant 0 : i32
    return %c0_i32, %c0_i32_0 : i32, i32
  }
  func.func @transform_4(%arg0: i32) -> (i32, i32) {
    %c0_i32 = arith.constant 0 : i32
    %c0_i32_0 = arith.constant 0 : i32
    %c0_i32_1 = arith.constant 0 : i32
    return %c0_i32, %c0_i32_0 : i32, i32
  }
  func.func @transform_5(%arg0: i32) -> (i32, i32) {
    %c0_i32 = arith.constant 0 : i32
    %c0_i32_0 = arith.constant 0 : i32
    %c0_i32_1 = arith.constant 0 : i32
    return %c0_i32, %c0_i32_0 : i32, i32
  }
  func.func @transform_6(%arg0: i32) -> (i32, i32) {
    %c0_i32 = arith.constant 0 : i32
    %c0_i32_0 = arith.constant 0 : i32
    %c0_i32_1 = arith.constant 0 : i32
    return %c0_i32, %c0_i32_0 : i32, i32
  }
  func.func @transform_7(%arg0: i32) -> (i32, i32) {
    %c0_i32 = arith.constant 0 : i32
    %c0_i32_0 = arith.constant 0 : i32
    %c0_i32_1 = arith.constant 0 : i32
    return %c0_i32, %c0_i32_0 : i32, i32
  }
  func.func @transform_8(%arg0: i32) -> (i32, i32) {
    %c0_i32 = arith.constant 0 : i32
    %c0_i32_0 = arith.constant 0 : i32
    %c0_i32_1 = arith.constant 0 : i32
    return %c0_i32, %c0_i32_0 : i32, i32
  }
  func.func @transform_9(%arg0: i32) -> (i32, i32) {
    %c0_i32 = arith.constant 0 : i32
    %c0_i32_0 = arith.constant 0 : i32
    %c0_i32_1 = arith.constant 0 : i32
    return %c0_i32, %c0_i32_0 : i32, i32
  }
  func.func @transform_10(%arg0: i32) -> (i32, i32) {
    %c0_i32 = arith.constant 0 : i32
    %c0_i32_0 = arith.constant 0 : i32
    %c0_i32_1 = arith.constant 0 : i32
    return %c0_i32, %c0_i32_0 : i32, i32
  }
  func.func @transform_11(%arg0: i32) -> (i32, i32) {
    %c0_i32 = arith.constant 0 : i32
    %c0_i32_0 = arith.constant 0 : i32
    return %arg0, %c0_i32 : i32, i32
  }
}

</mosaic_0001>

<llo_original>
// kernel: tpu_custom_call.1
$region0: #{tpu_custom_call.1}
  #allocation0 [shape = 'u32[]', space=smem, size = 0x4, offset = 0x4, fixed_abs, tag = 'smem constant byte address 0x4 - core index']
  #allocation1 [shape = 'u32[144,128]{1,0:T(1,128)}', space=vmem, size = 0x12000, scoped, tag = 'internal scratch']
  #allocation2 [shape = 'f32[1,1]{1,0:T(1,128)S(6)}', space=smem, size = 0x200, scoped, tag = 'scoped memory for tpu_custom_call.1']
  %s0 = inlined_call_operand.vmem [shape: f32[8,40], index: 0, kind: input, shape index: {}]
  %s1 = inlined_call_operand.vmem [shape: f32[8,4], index: 1, kind: input, shape index: {}]
  %s2 = inlined_call_operand.vmem [shape: f32[40,256], index: 2, kind: input, shape index: {}]
  %s3 = inlined_call_operand.vmem [shape: f32[1,256], index: 3, kind: input, shape index: {}]
  %s4 = inlined_call_operand.hbm [shape: f32[256,128], index: 4, kind: input, shape index: {}]
  %s5 = inlined_call_operand.vmem [shape: f32[4,128], index: 5, kind: input, shape index: {}]
  %s6 = inlined_call_operand.vmem [shape: f32[1,128], index: 6, kind: input, shape index: {}]
  %s7 = inlined_call_operand.vmem [shape: f32[128,64], index: 7, kind: input, shape index: {}]
  %s8 = inlined_call_operand.vmem [shape: f32[1,64], index: 8, kind: input, shape index: {}]
  %s9 = inlined_call_operand.vmem [shape: f32[1,64], index: 9, kind: input, shape index: {}]
  %s10 = inlined_call_operand.<no memory space> [shape: f32[1,1], index: 10, kind: input, shape index: {}]
  %s11 = inlined_call_operand.vmem [shape: f32[8,1], index: 11, kind: output, shape index: {}]
  %s12 = sld [smem:[#allocation0]]
  $region58: #{tpu_custom_call.1} parent=0
    _
  %s14 = ssub.s32 1, %s12
  %s15 = scalar_select 0, %s14, %s12
  %16 = sst [smem:[#allocation2]] %s10
  $region1: #{tpu_custom_call.1} parent=0
    #allocation3 [shape = 'u8[131072]{0}', space=vmem, size = 0x20000, scoped, tag = 'input window, operand 4, single buffered']
    #allocation4 [shape = 's32[1]{0}', space=sflag, size = 0x4, scoped, tag = 'scoped memory for tpu_custom_call.1']
    %17 = vsyncpa [#allocation4], 0
    // Predicated region
    $region2: #{tpu_custom_call.1} parent=1 // pred_check
      _
    $region3: #{tpu_custom_call.1} parent=1 // pred_check_branch
      %19 = sbr.rel (0) target = $region5
    $region4: #{tpu_custom_call.1} parent=1 // pred_region
      _
    $region5: #{tpu_custom_call.1} parent=1 // pred_fallthru
      _
    // Predicated region
    $region6: #{tpu_custom_call.1} parent=1 // pred_check
      _
    $region7: #{tpu_custom_call.1} parent=1 // pred_check_branch
      %21 = sbr.rel (0) target = $region9
    $region8: #{tpu_custom_call.1} parent=1 // pred_region
      _
    $region9: #{tpu_custom_call.1} parent=1 // pred_fallthru
      _
    // Predicated region
    $region10: #{tpu_custom_call.1} parent=1 // pred_check
      _
    $region11: #{tpu_custom_call.1} parent=1 // pred_check_branch
      %23 = sbr.rel (0) target = $region13
    $region12: #{tpu_custom_call.1} parent=1 // pred_region
      _
    $region13: #{tpu_custom_call.1} parent=1 // pred_fallthru
      _
    // Predicated region
    $region14: #{tpu_custom_call.1} parent=1 // pred_check
      _
    $region15: #{tpu_custom_call.1} parent=1 // pred_check_branch
      %25 = sbr.rel (0) target = $region17
    $region16: #{tpu_custom_call.1} parent=1 // pred_region
      _
    $region17: #{tpu_custom_call.1} parent=1 // pred_fallthru
      _
    // Predicated region
    $region18: #{tpu_custom_call.1} parent=1 // pred_check
      _
    $region19: #{tpu_custom_call.1} parent=1 // pred_check_branch
      %27 = sbr.rel (0) target = $region21
    $region20: #{tpu_custom_call.1} parent=1 // pred_region
      %s29 = ssub.s32 4096, 4096
      %30 = vsyncadd [#allocation4], %s29
      %s31 = sshll.u32 [#allocation3], 4
      %s32 = int_to_ptr.vmem [resolvable:$true] %s31
      %37 = dma.hbm_to_vmem [thread:$0]  %s4, 4096, %s32, [#allocation4], 128, 128, 8
    $region21: #{tpu_custom_call.1} parent=1 // pred_fallthru
      _
    // Predicated region
    $region22: #{tpu_custom_call.1} parent=1 // pred_check
      _
    $region23: #{tpu_custom_call.1} parent=1 // pred_check_branch
      %39 = sbr.rel (0) target = $region25
    $region24: #{tpu_custom_call.1} parent=1 // pred_region
      _
    $region25: #{tpu_custom_call.1} parent=1 // pred_fallthru
      _
    // Predicated region
    $region26: #{tpu_custom_call.1} parent=1 // pred_check
      _
    $region27: #{tpu_custom_call.1} parent=1 // pred_check_branch
      %41 = sbr.rel (0) target = $region29
    $region28: #{tpu_custom_call.1} parent=1 // pred_region
      _
    $region29: #{tpu_custom_call.1} parent=1 // pred_fallthru
      _
    // Predicated region
    $region30: #{tpu_custom_call.1} parent=1 // pred_check
      _
    $region31: #{tpu_custom_call.1} parent=1 // pred_check_branch
      %43 = sbr.rel (0) target = $region33
    $region32: #{tpu_custom_call.1} parent=1 // pred_region
      _
    $region33: #{tpu_custom_call.1} parent=1 // pred_fallthru
      _
    // Predicated region
    $region34: #{tpu_custom_call.1} parent=1 // pred_check
      _
    $region35: #{tpu_custom_call.1} parent=1 // pred_check_branch
      %45 = sbr.rel (0) target = $region37
    $region36: #{tpu_custom_call.1} parent=1 // pred_region
      _
    $region37: #{tpu_custom_call.1} parent=1 // pred_fallthru
      _
    // Predicated region
    $region38: #{tpu_custom_call.1} parent=1 // pred_check
      _
    $region39: #{tpu_custom_call.1} parent=1 // pred_check_branch
      %47 = sbr.rel (0) target = $region41
    $region40: #{tpu_custom_call.1} parent=1 // pred_region
      _
    $region41: #{tpu_custom_call.1} parent=1 // pred_fallthru
      _
    // Predicated region
    $region42: #{tpu_custom_call.1} parent=1 // pred_check
      _
    $region43: #{tpu_custom_call.1} parent=1 // pred_check_branch
      %49 = sbr.rel (0) target = $region45
    $region44: #{tpu_custom_call.1} parent=1 // pred_region
      _
    $region45: #{tpu_custom_call.1} parent=1 // pred_fallthru
      _
    // Predicated region
    $region46: #{tpu_custom_call.1} parent=1 // pred_check
      _
    $region47: #{tpu_custom_call.1} parent=1 // pred_check_branch
      %51 = sbr.rel (0) target = $region49
    $region48: #{tpu_custom_call.1} parent=1 // pred_region
      %52 = dma.done [#allocation4], 4096
    $region49: #{tpu_custom_call.1} parent=1 // pred_fallthru
      _
    %v53 = vld [vmem:[%s2] sm:$0xff]
    %v54 = vld [vmem:[%s2 + $0x8] sm:$0xff]
    %v55 = vld [vmem:[%s2 + $0x10] sm:$0xff]
    %v56 = vld [vmem:[%s2 + $0x18] sm:$0xff]
    %v57 = vld [vmem:[%s2 + $0x20] sm:$0xff]
    %v58 = vld [vmem:[%s2 + $0x28] sm:$0xff]
    %v59 = vld [vmem:[%s2 + $0x30] sm:$0xff]
    %v60 = vld [vmem:[%s2 + $0x38] sm:$0xff]
    %v61 = vld [vmem:[%s2 + $0x40] sm:$0xff]
    %v62 = vld [vmem:[%s2 + $0x48] sm:$0xff]
    %v63 = vld [vmem:[%s0] sm:$0xff]
    %v64 = vld [vmem:[%s3] sm:$0x3]
    %v66 = vlaneseq
    %v67 = vshrl.u32 %v66, 7
    %v68 = vsub.s32 0, %v67
    %v69 = vrot.slane %v64, %v68
    %v70 = vlaneseq
    %v71 = vshrl.u32 %v70, 7
    %v72 = vsub.s32 1, %v71
    %v73 = vrot.slane %v64, %v72
    %vm76 = vcmask 326656
    %v78 = vsel %vm76, %v63, 0
    %80 = vmatprep.subr.mxu0 %v54
    %81 = vmatpush1.msra.mxu0 %v53
    %82 = vmatprep.subr.mxu0 %v56
    %83 = vmatpush1.msra.mxu0 %v55
    %84 = vmatprep.subr.mxu0 %v58
    %85 = vmatpush1.msra.mxu0 %v57
    %86 = vmatprep.subr.mxu0 %v60
    %87 = vmatpush1.msra.mxu0 %v59
    %88 = vmatprep.subr.mxu0 %v62
    %89 = vmatpush1.msra.mxu0 %v61
    %90 = vmatprep.subr.mxu0 0.0
    %91 = vmatpush1.msra.mxu0 0.0
    %92 = vmatprep.subr.mxu0 0.0
    %93 = vmatpush1.msra.mxu0 0.0
    %94 = vmatprep.subr.mxu0 0.0
    %95 = vmatpush1.msra.mxu0 0.0
    %96 = vmatprep.subr.mxu0 0.0
    %97 = vmatpush1.msra.mxu0 0.0
    %98 = vmatprep.subr.mxu0 0.0
    %99 = vmatpush1.msra.mxu0 0.0
    %100 = vmatprep.subr.mxu0 0.0
    %101 = vmatpush1.msra.mxu0 0.0
    %102 = vmatprep.subr.mxu0 0.0
    %103 = vmatpush1.msra.mxu0 0.0
    %104 = vmatprep.subr.mxu0 0.0
    %105 = vmatpush1.msra.mxu0 0.0
    %106 = vmatprep.subr.mxu0 0.0
    %107 = vmatpush1.msra.mxu0 0.0
    %108 = vmatprep.subr.mxu0 0.0
    %109 = vmatpush1.msra.mxu0 0.0
    %110 = vmatprep.subr.mxu0 0.0
    %111 = vmatpush1.msra.mxu0 0.0
    %112 = vmatprep.subr.mxu0 0.0
    %113 = vmatpush1.msra.mxu0 0.0
    %114 = vmatprep.subr.mxu0 0.0
    %115 = vmatpush1.msra.mxu0 0.0
    %116 = vmatprep.subr.mxu0 0.0
    %117 = vmatpush1.msra.mxu0 0.0
    %118 = vmatprep.subr.mxu0 0.0
    %119 = vmatpush1.msra.mxu0 0.0
    %120 = vmatprep.subr.mxu0 0.0
    %121 = vmatpush1.msra.mxu0 0.0
    %122 = vmatprep.subr.mxu0 0.0
    %123 = vmatpush1.msra.mxu0 0.0
    %124 = vmatprep.subr.mxu0 0.0
    %125 = vmatpush1.msra.mxu0 0.0
    %126 = vmatprep.subr.mxu0 0.0
    %127 = vmatpush1.msra.mxu0 0.0
    %128 = vmatprep.subr.mxu0 0.0
    %129 = vmatpush1.msra.mxu0 0.0
    %130 = vmatprep.subr.mxu0 0.0
    %131 = vmatpush1.msra.mxu0 0.0
    %132 = vmatprep.subr.mxu0 0.0
    %133 = vmatpush1.msra.mxu0 0.0
    %134 = vmatprep.subr.mxu0 0.0
    %135 = vmatpush1.msra.mxu0 0.0
    %136 = vmatprep.subr.mxu0 0.0
    %137 = vmatpush1.msra.mxu0 0.0
    %138 = vmatprep.subr.mxu0 0.0
    %139 = vmatpush1.msra.mxu0 0.0
    %140 = vmatprep.subr.mxu0 0.0
    %141 = vmatpush1.msra.mxu0 0.0
    %142 = vmatprep.subr.mxu0 0.0
    %143 = vmatpush1.msra.mxu0 0.0
    %144 = vmatprep.mubr.f32.mxu0 0.0
    %145 = vmatmul.mubr.f32.gmra.mrb[0].mxu0 %v78
    %v146 = vpop.f32.mrb[0].mxu0
    %v147 = vadd.f32 %v69, %v146
    %v148 = vpop.f32.mrb[0].mxu0
    %v149 = vadd.f32 %v73, %v148
    %150 = vdwg.mxu0
    %v151 = vmax.f32 %v147, 0.0
    %v152 = vmax.f32 %v149, 0.0
    %v153 = vld [vmem:[#allocation3] sm:$0xff]
    %v154 = vld [vmem:[#allocation3 + $0x8] sm:$0xff]
    %v155 = vld [vmem:[#allocation3 + $0x10] sm:$0xff]
    %v156 = vld [vmem:[#allocation3 + $0x18] sm:$0xff]
    %v157 = vld [vmem:[#allocation3 + $0x20] sm:$0xff]
    %v158 = vld [vmem:[#allocation3 + $0x28] sm:$0xff]
    %v159 = vld [vmem:[#allocation3 + $0x30] sm:$0xff]
    %v160 = vld [vmem:[#allocation3 + $0x38] sm:$0xff]
    %v161 = vld [vmem:[#allocation3 + $0x40] sm:$0xff]
    %v162 = vld [vmem:[#allocation3 + $0x48] sm:$0xff]
    %v163 = vld [vmem:[#allocation3 + $0x50] sm:$0xff]
    %v164 = vld [vmem:[#allocation3 + $0x58] sm:$0xff]
    %v165 = vld [vmem:[#allocation3 + $0x60] sm:$0xff]
    %v166 = vld [vmem:[#allocation3 + $0x68] sm:$0xff]
    %v167 = vld [vmem:[#allocation3 + $0x70] sm:$0xff]
    %v168 = vld [vmem:[#allocation3 + $0x78] sm:$0xff]
    %v169 = vld [vmem:[#allocation3 + $0x80] sm:$0xff]
    %v170 = vld [vmem:[#allocation3 + $0x88] sm:$0xff]
    %v171 = vld [vmem:[#allocation3 + $0x90] sm:$0xff]
    %v172 = vld [vmem:[#allocation3 + $0x98] sm:$0xff]
    %v173 = vld [vmem:[#allocation3 + $0xa0] sm:$0xff]
    %v174 = vld [vmem:[#allocation3 + $0xa8] sm:$0xff]
    %v175 = vld [vmem:[#allocation3 + $0xb0] sm:$0xff]
    %v176 = vld [vmem:[#allocation3 + $0xb8] sm:$0xff]
    %v177 = vld [vmem:[#allocation3 + $0xc0] sm:$0xff]
    %v178 = vld [vmem:[#allocation3 + $0xc8] sm:$0xff]
    %v179 = vld [vmem:[#allocation3 + $0xd0] sm:$0xff]
    %v180 = vld [vmem:[#allocation3 + $0xd8] sm:$0xff]
    %v181 = vld [vmem:[#allocation3 + $0xe0] sm:$0xff]
    %v182 = vld [vmem:[#allocation3 + $0xe8] sm:$0xff]
    %v183 = vld [vmem:[#allocation3 + $0xf0] sm:$0xff]
    %v184 = vld [vmem:[#allocation3 + $0xf8] sm:$0xff]
    %v185 = vld [vmem:[%s6] sm:$0x1]
    %v187 = vlaneseq
    %v188 = vshrl.u32 %v187, 7
    %v189 = vsub.s32 0, %v188
    %v190 = vrot.slane %v185, %v189
    %192 = vmatprep.subr.mxu0 0.0
    %193 = vmatpush1.msra.mxu0 %v153
    %194 = vmatprep.subr.mxu0 0.0
    %195 = vmatpush1.msra.mxu0 %v154
    %196 = vmatprep.subr.mxu0 0.0
    %197 = vmatpush1.msra.mxu0 %v155
    %198 = vmatprep.subr.mxu0 0.0
    %199 = vmatpush1.msra.mxu0 %v156
    %200 = vmatprep.subr.mxu0 0.0
    %201 = vmatpush1.msra.mxu0 %v157
    %202 = vmatprep.subr.mxu0 0.0
    %203 = vmatpush1.msra.mxu0 %v158
    %204 = vmatprep.subr.mxu0 0.0
    %205 = vmatpush1.msra.mxu0 %v159
    %206 = vmatprep.subr.mxu0 0.0
    %207 = vmatpush1.msra.mxu0 %v160
    %208 = vmatprep.subr.mxu0 0.0
    %209 = vmatpush1.msra.mxu0 %v161
    %210 = vmatprep.subr.mxu0 0.0
    %211 = vmatpush1.msra.mxu0 %v162
    %212 = vmatprep.subr.mxu0 0.0
    %213 = vmatpush1.msra.mxu0 %v163
    %214 = vmatprep.subr.mxu0 0.0
    %215 = vmatpush1.msra.mxu0 %v164
    %216 = vmatprep.subr.mxu0 0.0
    %217 = vmatpush1.msra.mxu0 %v165
    %218 = vmatprep.subr.mxu0 0.0
    %219 = vmatpush1.msra.mxu0 %v166
    %220 = vmatprep.subr.mxu0 0.0
    %221 = vmatpush1.msra.mxu0 %v167
    %222 = vmatprep.subr.mxu0 0.0
    %223 = vmatpush1.msra.mxu0 %v168
    %224 = vmatprep.subr.mxu0 0.0
    %225 = vmatpush1.msra.mxu0 %v169
    %226 = vmatprep.subr.mxu0 0.0
    %227 = vmatpush1.msra.mxu0 %v170
    %228 = vmatprep.subr.mxu0 0.0
    %229 = vmatpush1.msra.mxu0 %v171
    %230 = vmatprep.subr.mxu0 0.0
    %231 = vmatpush1.msra.mxu0 %v172
    %232 = vmatprep.subr.mxu0 0.0
    %233 = vmatpush1.msra.mxu0 %v173
    %234 = vmatprep.subr.mxu0 0.0
    %235 = vmatpush1.msra.mxu0 %v174
    %236 = vmatprep.subr.mxu0 0.0
    %237 = vmatpush1.msra.mxu0 %v175
    %238 = vmatprep.subr.mxu0 0.0
    %239 = vmatpush1.msra.mxu0 %v176
    %240 = vmatprep.subr.mxu0 0.0
    %241 = vmatpush1.msra.mxu0 %v177
    %242 = vmatprep.subr.mxu0 0.0
    %243 = vmatpush1.msra.mxu0 %v178
    %244 = vmatprep.subr.mxu0 0.0
    %245 = vmatpush1.msra.mxu0 %v179
    %246 = vmatprep.subr.mxu0 0.0
    %247 = vmatpush1.msra.mxu0 %v180
    %248 = vmatprep.subr.mxu0 0.0
    %249 = vmatpush1.msra.mxu0 %v181
    %250 = vmatprep.subr.mxu0 0.0
    %251 = vmatpush1.msra.mxu0 %v182
    %252 = vmatprep.subr.mxu0 0.0
    %253 = vmatpush1.msra.mxu0 %v183
    %254 = vmatprep.subr.mxu0 0.0
    %255 = vmatpush1.msra.mxu0 %v184
    %256 = vmatprep.mubr.f32.mxu0 %v152
    %257 = vmatmul.mubr.f32.gmra.mrb[0].mxu0 %v151
    %v258 = vpop.f32.mrb[0].mxu0
    %v259 = vadd.f32 %v190, %v258
    %v260 = vpop.f32.mrb[0].mxu0
    %261 = vdwg.mxu0
    %v262 = vld [vmem:[%s1] sm:$0xff]
    %v263 = vld [vmem:[%s5] sm:$0xf]
    %265 = vset.pattern.permute.xlu0 0
    %266 = vperm.xlu0 %265, %v262
    %v267 = vpop.permute.xlu0 %266
    %v269 = vlaneseq
    %v270 = vshrl.u32 %v269, 7
    %v271 = vsub.s32 0, %v270
    %v272 = vrot.slane %v263, %v271
    %v273 = vmul.f32 %v267, %v272
    %v274 = vadd.f32 %v259, %v273
    %275 = vset.pattern.permute.xlu0 1
    %276 = vperm.xlu0 %275, %v262
    %v277 = vpop.permute.xlu0 %276
    %v279 = vlaneseq
    %v280 = vshrl.u32 %v279, 7
    %v281 = vsub.s32 1, %v280
    %v282 = vrot.slane %v263, %v281
    %v283 = vmul.f32 %v277, %v282
    %v284 = vadd.f32 %v274, %v283
    %285 = vset.pattern.permute.xlu0 2
    %286 = vperm.xlu0 %285, %v262
    %v287 = vpop.permute.xlu0 %286
    %v289 = vlaneseq
    %v290 = vshrl.u32 %v289, 7
    %v291 = vsub.s32 2, %v290
    %v292 = vrot.slane %v263, %v291
    %v293 = vmul.f32 %v287, %v292
    %v294 = vadd.f32 %v284, %v293
    %295 = vset.pattern.permute.xlu0 3
    %296 = vperm.xlu0 %295, %v262
    %v297 = vpop.permute.xlu0 %296
    %v299 = vlaneseq
    %v300 = vshrl.u32 %v299, 7
    %v301 = vsub.s32 3, %v300
    %v302 = vrot.slane %v263, %v301
    %v303 = vmul.f32 %v297, %v302
    %v304 = vadd.f32 %v294, %v303
    %v305 = vmax.f32 %v304, 0.0
    %v306 = vld [vmem:[%s7] sm:$0xff]
    %v307 = vld [vmem:[%s7 + $0x8] sm:$0xff]
    %v308 = vld [vmem:[%s7 + $0x10] sm:$0xff]
    %v309 = vld [vmem:[%s7 + $0x18] sm:$0xff]
    %v310 = vld [vmem:[%s7 + $0x20] sm:$0xff]
    %v311 = vld [vmem:[%s7 + $0x28] sm:$0xff]
    %v312 = vld [vmem:[%s7 + $0x30] sm:$0xff]
    %v313 = vld [vmem:[%s7 + $0x38] sm:$0xff]
    %v314 = vld [vmem:[%s7 + $0x40] sm:$0xff]
    %v315 = vld [vmem:[%s7 + $0x48] sm:$0xff]
    %v316 = vld [vmem:[%s7 + $0x50] sm:$0xff]
    %v317 = vld [vmem:[%s7 + $0x58] sm:$0xff]
    %v318 = vld [vmem:[%s7 + $0x60] sm:$0xff]
    %v319 = vld [vmem:[%s7 + $0x68] sm:$0xff]
    %v320 = vld [vmem:[%s7 + $0x70] sm:$0xff]
    %v321 = vld [vmem:[%s7 + $0x78] sm:$0xff]
    %v322 = vld [vmem:[%s8] sm:$0x1]
    %v324 = vlaneseq
    %v325 = vshrl.u32 %v324, 7
    %v326 = vsub.s32 0, %v325
    %v327 = vrot.slane %v322, %v326
    %329 = vmatprep.subr.mxu0 0.0
    %330 = vmatpush1.msra.mxu0 %v306
    %331 = vmatprep.subr.mxu0 0.0
    %332 = vmatpush1.msra.mxu0 %v307
    %333 = vmatprep.subr.mxu0 0.0
    %334 = vmatpush1.msra.mxu0 %v308
    %335 = vmatprep.subr.mxu0 0.0
    %336 = vmatpush1.msra.mxu0 %v309
    %337 = vmatprep.subr.mxu0 0.0
    %338 = vmatpush1.msra.mxu0 %v310
    %339 = vmatprep.subr.mxu0 0.0
    %340 = vmatpush1.msra.mxu0 %v311
    %341 = vmatprep.subr.mxu0 0.0
    %342 = vmatpush1.msra.mxu0 %v312
    %343 = vmatprep.subr.mxu0 0.0
    %344 = vmatpush1.msra.mxu0 %v313
    %345 = vmatprep.subr.mxu0 0.0
    %346 = vmatpush1.msra.mxu0 %v314
    %347 = vmatprep.subr.mxu0 0.0
    %348 = vmatpush1.msra.mxu0 %v315
    %349 = vmatprep.subr.mxu0 0.0
    %350 = vmatpush1.msra.mxu0 %v316
    %351 = vmatprep.subr.mxu0 0.0
    %352 = vmatpush1.msra.mxu0 %v317
    %353 = vmatprep.subr.mxu0 0.0
    %354 = vmatpush1.msra.mxu0 %v318
    %355 = vmatprep.subr.mxu0 0.0
    %356 = vmatpush1.msra.mxu0 %v319
    %357 = vmatprep.subr.mxu0 0.0
    %358 = vmatpush1.msra.mxu0 %v320
    %359 = vmatprep.subr.mxu0 0.0
    %360 = vmatpush1.msra.mxu0 %v321
    %361 = vmatprep.subr.mxu0 0.0
    %362 = vmatpush1.msra.mxu0 0.0
    %363 = vmatprep.subr.mxu0 0.0
    %364 = vmatpush1.msra.mxu0 0.0
    %365 = vmatprep.subr.mxu0 0.0
    %366 = vmatpush1.msra.mxu0 0.0
    %367 = vmatprep.subr.mxu0 0.0
    %368 = vmatpush1.msra.mxu0 0.0
    %369 = vmatprep.subr.mxu0 0.0
    %370 = vmatpush1.msra.mxu0 0.0
    %371 = vmatprep.subr.mxu0 0.0
    %372 = vmatpush1.msra.mxu0 0.0
    %373 = vmatprep.subr.mxu0 0.0
    %374 = vmatpush1.msra.mxu0 0.0
    %375 = vmatprep.subr.mxu0 0.0
    %376 = vmatpush1.msra.mxu0 0.0
    %377 = vmatprep.subr.mxu0 0.0
    %378 = vmatpush1.msra.mxu0 0.0
    %379 = vmatprep.subr.mxu0 0.0
    %380 = vmatpush1.msra.mxu0 0.0
    %381 = vmatprep.subr.mxu0 0.0
    %382 = vmatpush1.msra.mxu0 0.0
    %383 = vmatprep.subr.mxu0 0.0
    %384 = vmatpush1.msra.mxu0 0.0
    %385 = vmatprep.subr.mxu0 0.0
    %386 = vmatpush1.msra.mxu0 0.0
    %387 = vmatprep.subr.mxu0 0.0
    %388 = vmatpush1.msra.mxu0 0.0
    %389 = vmatprep.subr.mxu0 0.0
    %390 = vmatpush1.msra.mxu0 0.0
    %391 = vmatprep.subr.mxu0 0.0
    %392 = vmatpush1.msra.mxu0 0.0
    %393 = vmatprep.mubr.f32.mxu0 0.0
    %394 = vmatmul.mubr.f32.gmra.mrb[0].mxu0 %v305
    %v395 = vpop.f32.mrb[0].mxu0
    %v396 = vadd.f32 %v327, %v395
    %v397 = vpop.f32.mrb[0].mxu0
    %398 = vdwg.mxu0
    %v399 = vmax.f32 %v396, 0.0
    %v400 = vld [vmem:[%s9] sm:$0x1]
    %v402 = vlaneseq
    %v403 = vshrl.u32 %v402, 7
    %v404 = vsub.s32 0, %v403
    %v405 = vrot.slane %v400, %v404
    %v407 = vmul.f32 %v399, %v405
    %vm408 = vcmask 523264
    %v409 = vsel %vm408, %v407, 0.0
    %410 = vadd.xlane.f32.xlu0 %v409
    %v411 = vpop.xlane.xlu0 %410
    %s412 = sld [smem:[#allocation2]]
    %v413 = vstv %s412
    %v414 = vadd.f32 %v411, %v413
    %vm415 = vcmask 7168
    %416 = vst.msk [vmem:[%s11] sm:$0xff] %vm415, %v414
    // Predicated region
    $region50: #{tpu_custom_call.1} parent=1 // pred_check
      _
    $region51: #{tpu_custom_call.1} parent=1 // pred_check_branch
      %418 = sbr.rel (0) target = $region53
    $region52: #{tpu_custom_call.1} parent=1 // pred_region
      _
    $region53: #{tpu_custom_call.1} parent=1 // pred_fallthru
      _
    // Predicated region
    $region54: #{tpu_custom_call.1} parent=1 // pred_check
      _
    $region55: #{tpu_custom_call.1} parent=1 // pred_check_branch
      %420 = sbr.rel (0) target = $region57
    $region56: #{tpu_custom_call.1} parent=1 // pred_region
      _
    $region57: #{tpu_custom_call.1} parent=1 // pred_fallthru
      _
    %421 = vsyncpa [#allocation4], 1

</llo_original>
